<compile_context>
chip_gen: v5e
topology: v5e:2x2
jax: 0.10.0
libtpu: 0.0.40
codegen_flags: <defaults>
</compile_context>

<pallas_src>
import functools

import jax
import jax.numpy as jnp
from jax.experimental import pallas as pl
from jax.experimental.pallas import tpu as pltpu

LANE = 128        # output-channel padding target (lane-dense stores)
MATMUL_TM = 256   # row tile for conv matmuls (multiple of 16 for bf16 sublane packing)
ROW_TM = 512      # row tile for elementwise kernels


def _round_up(x, m):
    return (x + m - 1) // m * m


# ----------------------------------------------------------------------------- kernels

def _ws_matmul_kernel(a_ref, w_ref, b_ref, o_ref, *, negative_slope):
    # bf16 x bf16 -> fp32 accumulate on the MXU; bias + LeakyReLU fused in fp32.
    acc = jnp.dot(a_ref[...], w_ref[...], preferred_element_type=jnp.float32)
    acc = acc + b_ref[...]
    if negative_slope is not None:
        acc = jnp.where(acc > 0, acc, negative_slope * acc)
    o_ref[...] = acc.astype(o_ref.dtype)


def _avg4_kernel(a_ref, b_ref, c_ref, d_ref, o_ref):
    # 2x2 average pooling: mean of the four shifted NHWC views (lane-dense last dim).
    o_ref[...] = 0.25 * (a_ref[...] + b_ref[...] + c_ref[...] + d_ref[...])


def _fade_kernel(alpha_ref, ds_ref, out_ref, o_ref):
    a = alpha_ref[0, 0]
    o_ref[...] = a * out_ref[...] + (1.0 - a) * ds_ref[...]


def _mbstd_kernel(x_ref, o_ref, *, c_real):
    # x: (N, H*W, C_pad); statistic over the real channels only (padded channels are 0).
    x = x_ref[...][:, :, :c_real]                      # (N, H*W, C_real)
    n = x.shape[0]
    mean = jnp.mean(x, axis=0, keepdims=True)
    var = jnp.sum((x - mean) ** 2, axis=0, keepdims=True) / (n - 1)  # unbiased (torch.std)
    std = jnp.sqrt(var)                                # (1, H*W, C_real)
    m1 = jnp.mean(std, axis=1)                         # (1, C_real)
    o_ref[...] = jnp.mean(m1, axis=1, keepdims=True)   # (1, 1)


# ----------------------------------------------------------------------------- kernel wrappers

def ws_matmul(a, w, b, negative_slope=None):
    """leaky(a @ w + b): a (M,K) bf16 patches, w (K,Np) bf16 (WS scale folded), b (1,Np) f32."""
    M, K = a.shape
    Kw, Np = w.shape
    assert K == Kw and Np % LANE == 0
    tm = M if M <= MATMUL_TM else MATMUL_TM
    cost = pl.CostEstimate(flops=2 * M * K * Np, transcendentals=0,
                           bytes_accessed=M * K * 2 + K * Np * 2 + M * Np * 4 + Np * 4)
    return pl.pallas_call(
        functools.partial(_ws_matmul_kernel, negative_slope=negative_slope),
        out_shape=jax.ShapeDtypeStruct((M, Np), jnp.float32),
        grid=(pl.cdiv(M, tm),),
        in_specs=[pl.BlockSpec((tm, K), lambda i: (i, 0)),
                  pl.BlockSpec((K, Np), lambda i: (0, 0)),
                  pl.BlockSpec((1, Np), lambda i: (0, 0))],
        out_specs=pl.BlockSpec((tm, Np), lambda i: (i, 0)),
        compiler_params=pltpu.CompilerParams(
            dimension_semantics=("parallel",),
            vmem_limit_bytes=32 * 1024 * 1024),
        cost_estimate=cost,
    )(a, w, b)


def ws_conv2d_nhwc(x, cp, padding=0, act=None):
    """WSConv2d on an NHWC activation. Returns (N, Ho, Wo, Cout_pad) fp32 (padding is zeros)."""
    kh, kw = cp["kh"], cp["kw"]
    x = x.astype(jnp.bfloat16)                         # MXU operand dtype; scale is in w2
    if padding > 0:
        x = jnp.pad(x, ((0, 0), (padding, padding), (padding, padding), (0, 0)))
    n, hp, wp, cin = x.shape
    ho, wo = hp - kh + 1, wp - kw + 1
    if kh == 1 and kw == 1:
        patches = x.reshape(n * ho * wo, cin)
    else:
        # im2col (glue): concat along channels in (kh, kw, ci) order -> matches w2 rows.
        cols = [x[:, i:i + ho, j:j + wo, :] for i in range(kh) for j in range(kw)]
        patches = jnp.concatenate(cols, axis=-1).reshape(n * ho * wo, kh * kw * cin)
    # TODO(synk): fuse conv1->conv2(->pool) per ConvBlock / do in-kernel im2col over shifted
    # windows so the 9x patch matrix never round-trips through HBM.
    out = ws_matmul(patches, cp["w2"], cp["b2"], negative_slope=act)
    return out.reshape(n, ho, wo, -1)


def avg_pool_2x2_nhwc(x):
    n, h, w, c = x.shape
    ho, wo = h // 2, w // 2
    m = n * ho * wo
    views = [x[:, i::2, j::2, :].reshape(m, c) for i in (0, 1) for j in (0, 1)]
    tm = m if m <= ROW_TM else ROW_TM
    out = pl.pallas_call(
        _avg4_kernel,
        out_shape=jax.ShapeDtypeStruct((m, c), x.dtype),
        grid=(pl.cdiv(m, tm),),
        in_specs=[pl.BlockSpec((tm, c), lambda i: (i, 0))] * 4,
        out_specs=pl.BlockSpec((tm, c), lambda i: (i, 0)),
        compiler_params=pltpu.CompilerParams(dimension_semantics=("parallel",)),
    )(*views)
    return out.reshape(n, ho, wo, c)


def fade_in(alpha, downscaled, out):
    n, h, w, c = out.shape
    m = n * h * w
    tm = m if m <= ROW_TM else ROW_TM
    a = jnp.asarray(alpha, jnp.float32).reshape(1, 1)
    res = pl.pallas_call(
        _fade_kernel,
        out_shape=jax.ShapeDtypeStruct((m, c), jnp.float32),
        grid=(pl.cdiv(m, tm),),
        in_specs=[pl.BlockSpec((1, 1), lambda i: (0, 0),
                               memory_space=pltpu.MemorySpace.SMEM),
                  pl.BlockSpec((tm, c), lambda i: (i, 0)),
                  pl.BlockSpec((tm, c), lambda i: (i, 0))],
        out_specs=pl.BlockSpec((tm, c), lambda i: (i, 0)),
        compiler_params=pltpu.CompilerParams(dimension_semantics=("parallel",)),
    )(a, downscaled.reshape(m, c).astype(jnp.float32), out.reshape(m, c).astype(jnp.float32))
    return res.reshape(n, h, w, c)


def minibatch_std_nhwc(x, c_real):
    """torch-style minibatch std; returns the real channels + 1 stat channel (N,H,W,c_real+1)."""
    # Note: matches torch's unbiased std; batch size 1 gives NaN in torch as well.
    n, h, w, cp = x.shape
    x = x.astype(jnp.float32)
    stat = pl.pallas_call(
        functools.partial(_mbstd_kernel, c_real=c_real),
        out_shape=jax.ShapeDtypeStruct((1, 1), jnp.float32),
        grid=(1,),
        in_specs=[pl.BlockSpec((n, h * w, cp), lambda i: (0, 0, 0))],
        out_specs=pl.BlockSpec((1, 1), lambda i: (0, 0)),
    )(x.reshape(n, h * w, cp))
    stat_map = jnp.broadcast_to(stat.reshape(1, 1, 1, 1), (n, h, w, 1))
    return jnp.concatenate([x[..., :c_real], stat_map], axis=-1)


# ----------------------------------------------------------------------------- parameters

def init_wsconv(key, cin, cout, k, gain=2):
    w = jax.random.normal(key, (cout, cin, k, k), dtype=jnp.float32)   # nn.init.normal_
    b = jnp.zeros((cout,), jnp.float32)                                # zero bias
    scale = (gain / (cin * k * k)) ** 0.5
    return {"w": w, "b": b, "scale": scale}


def init_discriminator(key, in_channels, img_channels=3,
                       factors=(1, 1, 1, 1, 1 / 2, 1 / 4, 1 / 8, 1 / 16, 1 / 32)):
    keys = iter(jax.random.split(key, 64))
    prog_blocks, rgb_layers = [], []
    for i in range(len(factors) - 1, 0, -1):
        cin = int(in_channels * factors[i])
        cout = int(in_channels * factors[i - 1])
        prog_blocks.append({"conv1": init_wsconv(next(keys), cin, cout, 3),
                            "conv2": init_wsconv(next(keys), cout, cout, 3)})
        rgb_layers.append(init_wsconv(next(keys), img_channels, cin, 1))
    rgb_layers.append(init_wsconv(next(keys), img_channels, in_channels, 1))  # initial_rgb
    final = [init_wsconv(next(keys), in_channels + 1, in_channels, 3),
             init_wsconv(next(keys), in_channels, in_channels, 4),
             init_wsconv(next(keys), in_channels, 1, 1)]
    return {"prog_blocks": prog_blocks, "rgb_layers": rgb_layers, "final": final}


def prep_conv(p, cin_eff):
    """Fold WS scale into the weight, pad Cin to cin_eff (zero rows) and Cout to a multiple
    of 128 (zero cols / zero bias), flatten to (K, Cout_pad) with (kh, kw, ci) row order."""
    w, b, s = p["w"], p["b"], p["scale"]
    cout, cin, kh, kw = w.shape
    np_ = _round_up(cout, LANE)
    if cin_eff > cin:
        w = jnp.pad(w, ((0, 0), (0, cin_eff - cin), (0, 0), (0, 0)))
    w2 = (w * s).transpose(2, 3, 1, 0).reshape(kh * kw * cin_eff, cout)   # conv(x*s,W)=conv(x,sW)
    w2 = jnp.pad(w2, ((0, 0), (0, np_ - cout))).astype(jnp.bfloat16)
    b2 = jnp.pad(b, (0, np_ - cout)).astype(jnp.float32).reshape(1, np_)
    return {"w2": w2, "b2": b2, "kh": kh, "kw": kw, "cout": cout}


def prepare_discriminator(params, in_channels, img_channels=3):
    prepped = {"prog_blocks": [], "rgb_layers": [], "final": []}
    for blk in params["prog_blocks"]:
        prepped["prog_blocks"].append({
            "conv1": prep_conv(blk["conv1"], _round_up(blk["conv1"]["w"].shape[1], LANE)),
            "conv2": prep_conv(blk["conv2"], _round_up(blk["conv2"]["w"].shape[1], LANE)),
        })
    for rgb in params["rgb_layers"]:
        prepped["rgb_layers"].append(prep_conv(rgb, img_channels))       # raw RGB input
    f = params["final"]
    prepped["final"] = [
        prep_conv(f[0], in_channels + 1),                                # mbstd concat input
        prep_conv(f[1], _round_up(in_channels, LANE)),
        prep_conv(f[2], _round_up(in_channels, LANE)),
    ]
    return prepped


# ----------------------------------------------------------------------------- forward

def conv_block(pp, x):
    # ConvBlock with use_pixelnorm=False: leaky(conv1) -> leaky(conv2), LeakyReLU fused in-kernel.
    x = ws_conv2d_nhwc(x, pp["conv1"], padding=1, act=0.2)
    x = ws_conv2d_nhwc(x, pp["conv2"], padding=1, act=0.2)
    return x


def final_block(ps, x):
    x = ws_conv2d_nhwc(x, ps[0], padding=1, act=0.2)    # 3x3 pad 1
    x = ws_conv2d_nhwc(x, ps[1], padding=0, act=0.2)    # 4x4 no pad
    x = ws_conv2d_nhwc(x, ps[2], padding=0, act=None)   # 1x1 head
    n = x.shape[0]
    return x[..., :ps[2]["cout"]].reshape(n, -1)        # drop lane padding -> (N, 1)


def discriminator_forward(prepped, x_nchw, alpha, steps, in_channels):
    n_blocks = len(prepped["prog_blocks"])               # 8
    cur_step = n_blocks - steps
    x = jnp.transpose(x_nchw, (0, 2, 3, 1))              # NCHW -> NHWC once at the boundary

    rgb = prepped["rgb_layers"][cur_step]
    out = ws_conv2d_nhwc(x, rgb, padding=0, act=0.2)

    if steps == 0:
        out = minibatch_std_nhwc(out, in_channels)
        return final_block(prepped["final"], out)

    rgb_next = prepped["rgb_layers"][cur_step + 1]
    downscaled = ws_conv2d_nhwc(avg_pool_2x2_nhwc(x), rgb_next, padding=0, act=0.2)
    out = avg_pool_2x2_nhwc(conv_block(prepped["prog_blocks"][cur_step], out))
    out = fade_in(alpha, downscaled, out)

    for step in range(cur_step + 1, n_blocks):
        out = avg_pool_2x2_nhwc(conv_block(prepped["prog_blocks"][step], out))

    out = minibatch_std_nhwc(out, in_channels)
    return final_block(prepped["final"], out)


# ----------------------------------------------------------------------------- main

if __name__ == "__main__":
    key = jax.random.PRNGKey(0)
    pkey, xkey = jax.random.split(key)

    in_channels = 32
    img_channels = 3
    steps = 2                      # => input spatial size 4 * 2**steps = 16
    alpha = 0.5

    params = init_discriminator(pkey, in_channels, img_channels)
    prepped = prepare_discriminator(params, in_channels, img_channels)
    x = jax.random.normal(xkey, (2, img_channels, 16, 16), dtype=jnp.float32)

    out = discriminator_forward(prepped, x, alpha, steps, in_channels)
    out = jax.block_until_ready(out)

    assert out.shape == (2, 1), out.shape
    assert out.dtype == jnp.float32
    assert bool(jnp.all(jnp.isfinite(out)))
    print("KERNEL_OK")
</pallas_src>

<mosaic_0001>
module attributes {stable_mosaic.version = 11 : i64} {
  func.func @_ws_matmul_kernel(%arg0: i32, %arg1: memref<256x3xbf16, #tpu.memory_space<vmem>>, %arg2: memref<3x128xbf16, #tpu.memory_space<vmem>>, %arg3: memref<1x128xf32, #tpu.memory_space<vmem>>, %arg4: memref<256x128xf32, #tpu.memory_space<vmem>>) attributes {dimension_semantics = [#tpu.dimension_semantics<parallel>], iteration_bounds = array<i64: 2>, scalar_prefetch = 0 : i64, scratch_operands = 0 : i64, tpu.core_type = #tpu.core_type<tc>, window_params = [{transform_indices = @transform_0, window_bounds = array<i64: 256, 3>}, {pipeline_mode = #tpu.pipeline_mode<synchronous>, transform_indices = @transform_1, window_bounds = array<i64: 3, 128>}, {pipeline_mode = #tpu.pipeline_mode<synchronous>, transform_indices = @transform_2, window_bounds = array<i64: 1, 128>}, {transform_indices = @transform_3, window_bounds = array<i64: 256, 128>}]} {
    %c0 = arith.constant 0 : index
    %c0_0 = arith.constant 0 : index
    %0 = vector.load %arg1[%c0, %c0_0] : memref<256x3xbf16, #tpu.memory_space<vmem>>, vector<256x3xbf16>
    %c0_1 = arith.constant 0 : index
    %c0_2 = arith.constant 0 : index
    %1 = vector.load %arg2[%c0_1, %c0_2] : memref<3x128xbf16, #tpu.memory_space<vmem>>, vector<3x128xbf16>
    %cst = arith.constant dense<0.000000e+00> : vector<256x128xf32>
    %2 = tpu.matmul %0, %1, %cst {dimension_numbers = #tpu.dot_dimension_numbers<[1], [0], [0], [1], [0, 0, 1, 1], [], []>} : vector<256x3xbf16>, vector<3x128xbf16>, vector<256x128xf32> -> vector<256x128xf32>
    %c0_3 = arith.constant 0 : index
    %c0_4 = arith.constant 0 : index
    %3 = vector.load %arg3[%c0_3, %c0_4] : memref<1x128xf32, #tpu.memory_space<vmem>>, vector<1x128xf32>
    %4 = vector.broadcast %3 : vector<1x128xf32> to vector<256x128xf32>
    %5 = arith.addf %2, %4 : vector<256x128xf32>
    %cst_5 = arith.constant 0.000000e+00 : f32
    %6 = vector.broadcast %cst_5 : f32 to vector<256x128xf32>
    %7 = arith.cmpf ogt, %5, %6 : vector<256x128xf32>
    %cst_6 = arith.constant 2.000000e-01 : f32
    %8 = vector.broadcast %cst_6 : f32 to vector<256x128xf32>
    %9 = arith.mulf %8, %5 : vector<256x128xf32>
    %10 = arith.select %7, %5, %9 : vector<256x128xi1>, vector<256x128xf32>
    %c0_7 = arith.constant 0 : index
    %c0_8 = arith.constant 0 : index
    %11 = vector.load %arg4[%c0_7, %c0_8] : memref<256x128xf32, #tpu.memory_space<vmem>>, vector<256x128xf32>
    tpu.vector_store %arg4[%c0_7, %c0_8], %10 {strides = array<i32>} : memref<256x128xf32, #tpu.memory_space<vmem>>, vector<256x128xf32>,
    return
  }
  func.func @transform_0(%arg0: i32) -> (i32, i32) {
    %c0_i32 = arith.constant 0 : i32
    %c0_i32_0 = arith.constant 0 : i32
    return %arg0, %c0_i32 : i32, i32
  }
  func.func @transform_1(%arg0: i32) -> (i32, i32) {
    %c0_i32 = arith.constant 0 : i32
    %c0_i32_0 = arith.constant 0 : i32
    %c0_i32_1 = arith.constant 0 : i32
    return %c0_i32, %c0_i32_0 : i32, i32
  }
  func.func @transform_2(%arg0: i32) -> (i32, i32) {
    %c0_i32 = arith.constant 0 : i32
    %c0_i32_0 = arith.constant 0 : i32
    %c0_i32_1 = arith.constant 0 : i32
    return %c0_i32, %c0_i32_0 : i32, i32
  }
  func.func @transform_3(%arg0: i32) -> (i32, i32) {
    %c0_i32 = arith.constant 0 : i32
    %c0_i32_0 = arith.constant 0 : i32
    return %arg0, %c0_i32 : i32, i32
  }
}

</mosaic_0001>

<llo_original>
// kernel: tpu_custom_call.1
$region0: #{tpu_custom_call.1}
  #allocation0 [shape = 'u32[]', space=smem, size = 0x4, offset = 0x4, fixed_abs, tag = 'smem constant byte address 0x4 - core index']
  #allocation1 [shape = 'u32[72,128]{1,0:T(1,128)}', space=vmem, size = 0x9000, scoped, tag = 'internal scratch']
  %s0 = inlined_call_operand.vmem [shape: bf16[512,3], index: 0, kind: input, shape index: {}]
  %s1 = inlined_call_operand.vmem [shape: bf16[3,128], index: 1, kind: input, shape index: {}]
  %s2 = inlined_call_operand.vmem [shape: f32[1,128], index: 2, kind: input, shape index: {}]
  %s3 = inlined_call_operand.hbm [shape: f32[512,128], index: 3, kind: output, shape index: {}]
  %s4 = sld [smem:[#allocation0]]
  $region45: #{tpu_custom_call.1} parent=0
    _
  %s6 = ssub.s32 1, %s4
  %s7 = scalar_select 0, %s6, %s4
  $region1: #{tpu_custom_call.1} parent=0
    #allocation2 [shape = 'u8[262144]{0}', space=vmem, size = 0x40000, scoped, tag = 'output window, operand 0']
    #allocation3 [shape = 's32[2]{0}', space=sflag, size = 0x8, scoped, tag = 'scoped memory for tpu_custom_call.1']
    %8 = vsyncpa [#allocation3], 0
    %s9 = scalar_lea.sflag [#allocation3], 1
    %10 = vsyncpa %s9, 0
    loop: start=0, step=1, limit=4
    $region2: #{tpu_custom_call.1} parent=1 // loop_pre_header
      _
    $region3: #{tpu_custom_call.1} parent=1 // loop_header
      %s12 = sphi 0, %s16
      %p13 = scmp.ge.s32.totalorder %s12, 4
      %s22 = sphi 0, %s24
      %s25 = sphi 0, %s22
      %s26 = sphi 0, %s25
      %s42 = sphi 0, %s26
      %s46 = sphi 0, %s46
      %s48 = sphi 0, %s46
      %s49 = sphi 0, %s48
      %s63 = sphi 0, %s49
      %s67 = sphi 0, %s67
      %s69 = sphi 0, %s67
      %s70 = sphi 0, %s69
      %s84 = sphi 0, %s70
      %s90 = sphi 0, %s92
      %s93 = sphi 0, %s90
      %s94 = sphi 0, %s93
      %s110 = sphi 0, %s94
    $region4: #{tpu_custom_call.1} parent=1 // loop_header_branch
      %15 = sbr.rel (%p13) target = $region8
    $region5: #{tpu_custom_call.1} parent=1 // loop_body
      %s17 = ssub.s32 %s12, 1
      %s18 = ssub.s32 %s12, 2
      %s19 = sadd.s32 %s12, 1
      %s20 = ssub.s32 %s12, %s19
      %p21 = scmp.eq.s32.totalorder %s20, 0
      %s23 = sadd.s32 %s22, 1
      %s24 = scalar_select %p21, %s22, %s23
      %p27 = pneg %p21
      %p28 = scmp.eq.s32.totalorder %s12, 1
      %p29 = por %p27, %p28
      %p30 = scmp.ne.s32.totalorder %s22, %s25
      %p31 = scmp.eq.s32.totalorder %s12, 0
      %p32 = por %p30, %p31
      %p33 = scmp.ne.s32.totalorder %s22, %s25
      %p34 = scmp.eq.s32.totalorder %s17, 1
      %p35 = por %p33, %p34
      %p36 = scmp.ne.s32.totalorder %s25, %s26
      %p37 = scmp.eq.s32.totalorder %s17, 0
      %p38 = por %p36, %p37
      %p39 = scmp.ne.s32.totalorder %s25, %s26
      %p40 = scmp.eq.s32.totalorder %s18, 1
      %p41 = por %p39, %p40
      %p43 = scmp.ne.s32.totalorder %s26, %s42
      %p44 = scmp.eq.s32.totalorder %s18, 0
      %p45 = por %p43, %p44
      %s47 = sadd.s32 %s46, 1
      %p50 = scmp.eq.s32.totalorder %s12, 1
      %p51 = scmp.ne.s32.totalorder %s46, %s48
      %p52 = scmp.eq.s32.totalorder %s12, 0
      %p53 = por %p51, %p52
      %p54 = scmp.ne.s32.totalorder %s46, %s48
      %p55 = scmp.eq.s32.totalorder %s17, 1
      %p56 = por %p54, %p55
      %p57 = scmp.ne.s32.totalorder %s48, %s49
      %p58 = scmp.eq.s32.totalorder %s17, 0
      %p59 = por %p57, %p58
      %p60 = scmp.ne.s32.totalorder %s48, %s49
      %p61 = scmp.eq.s32.totalorder %s18, 1
      %p62 = por %p60, %p61
      %p64 = scmp.ne.s32.totalorder %s49, %s63
      %p65 = scmp.eq.s32.totalorder %s18, 0
      %p66 = por %p64, %p65
      %s68 = sadd.s32 %s67, 1
      %p71 = scmp.eq.s32.totalorder %s12, 1
      %p72 = scmp.ne.s32.totalorder %s67, %s69
      %p73 = scmp.eq.s32.totalorder %s12, 0
      %p74 = por %p72, %p73
      %p75 = scmp.ne.s32.totalorder %s67, %s69
      %p76 = scmp.eq.s32.totalorder %s17, 1
      %p77 = por %p75, %p76
      %p78 = scmp.ne.s32.totalorder %s69, %s70
      %p79 = scmp.eq.s32.totalorder %s17, 0
      %p80 = por %p78, %p79
      %p81 = scmp.ne.s32.totalorder %s69, %s70
      %p82 = scmp.eq.s32.totalorder %s18, 1
      %p83 = por %p81, %p82
      %p85 = scmp.ne.s32.totalorder %s70, %s84
      %p86 = scmp.eq.s32.totalorder %s18, 0
      %p87 = por %p85, %p86
      %s88 = ssub.s32 %s12, %s19
      %p89 = scmp.eq.s32.totalorder %s88, 0
      %s91 = sadd.s32 %s90, 1
      %s92 = scalar_select %p89, %s90, %s91
      %p95 = pneg %p89
      %p96 = scmp.eq.s32.totalorder %s12, 1
      %p97 = por %p95, %p96
      %p98 = scmp.ne.s32.totalorder %s90, %s93
      %p99 = scmp.eq.s32.totalorder %s12, 0
      %p100 = por %p98, %p99
      %p101 = scmp.ne.s32.totalorder %s90, %s93
      %p102 = scmp.eq.s32.totalorder %s17, 1
      %p103 = por %p101, %p102
      %p104 = scmp.ne.s32.totalorder %s93, %s94
      %p105 = scmp.eq.s32.totalorder %s17, 0
      %p106 = por %p104, %p105
      %p107 = scmp.ne.s32.totalorder %s93, %s94
      %p108 = scmp.eq.s32.totalorder %s18, 1
      %p109 = por %p107, %p108
      %p111 = scmp.ne.s32.totalorder %s94, %s110
      %p112 = scmp.eq.s32.totalorder %s18, 0
      %p113 = por %p111, %p112
      %p114 = scmp.le.s32.totalorder 1, %s12
      %p115 = scmp.lt.s32.totalorder %s12, 3
      %p116 = pnand %p114, %p115
      %p117 = pneg %p116
      // Predicated region
      $region9: #{tpu_custom_call.1} parent=5 // pred_check
        _
      $region10: #{tpu_custom_call.1} parent=5 // pred_check_branch
        %119 = sbr.rel (%p116) target = $region12
      $region11: #{tpu_custom_call.1} parent=5 // pred_region
        %s120 = ssub.s32 %s12, 1
        // Predicated region
        $region13: #{tpu_custom_call.1} parent=11 // pred_check
          %p121 = pneg %p59
        $region14: #{tpu_custom_call.1} parent=11 // pred_check_branch
          %123 = sbr.rel (%p121) target = $region16
        $region15: #{tpu_custom_call.1} parent=11 // pred_region
          _
        $region16: #{tpu_custom_call.1} parent=11 // pred_fallthru
          _
        // Predicated region
        $region17: #{tpu_custom_call.1} parent=11 // pred_check
          %p124 = pneg %p80
        $region18: #{tpu_custom_call.1} parent=11 // pred_check_branch
          %126 = sbr.rel (%p124) target = $region20
        $region19: #{tpu_custom_call.1} parent=11 // pred_region
          _
        $region20: #{tpu_custom_call.1} parent=11 // pred_fallthru
          _
      $region12: #{tpu_custom_call.1} parent=5 // pred_fallthru
        _
      %p127 = scmp.lt.s32.totalorder %s12, 2
      // Predicated region
      $region21: #{tpu_custom_call.1} parent=5 // pred_check
        %p128 = pneg %p127
      $region22: #{tpu_custom_call.1} parent=5 // pred_check_branch
        %130 = sbr.rel (%p128) target = $region24
      $region23: #{tpu_custom_call.1} parent=5 // pred_region
        // Predicated region
        $region25: #{tpu_custom_call.1} parent=23 // pred_check
          %p131 = pneg %p32
        $region26: #{tpu_custom_call.1} parent=23 // pred_check_branch
          %133 = sbr.rel (%p131) target = $region28
        $region27: #{tpu_custom_call.1} parent=23 // pred_region
          %s134 = smul.u32 32, %s12
          %p135 = scmp.lt.s32.totalorder %s134, 63
          %s136 = scalar_select %p135, %s134, 63
          %s137 = smul.addr %s136, 4
          %s138 = scalar_lea.vmem %s0, %s137
          %s139 = smul.u32 32, %s12
        $region28: #{tpu_custom_call.1} parent=23 // pred_fallthru
          _
      $region24: #{tpu_custom_call.1} parent=5 // pred_fallthru
        _
      %p140 = scmp.le.s32.totalorder 1, %s12
      %p141 = scmp.lt.s32.totalorder %s12, 3
      %p142 = pnand %p140, %p141
      %p143 = pneg %p142
      // Predicated region
      $region29: #{tpu_custom_call.1} parent=5 // pred_check
        _
      $region30: #{tpu_custom_call.1} parent=5 // pred_check_branch
        %145 = sbr.rel (%p142) target = $region32
      $region31: #{tpu_custom_call.1} parent=5 // pred_region
        %s146 = ssub.s32 %s12, 1
        %s147 = smul.u32 32, %s17
        %p148 = scmp.lt.s32.totalorder %s147, 63
        %s149 = scalar_select %p148, %s147, 63
        %s150 = smul.addr %s149, 4
        %s151 = scalar_lea.vmem %s0, %s150
        %p152 = pneg %p38
        %p153 = pneg %p35
        %p154 = pneg %p59
        %p155 = pneg %p56
        %p156 = pneg %p80
        %p157 = pneg %p77
        %p158 = pneg %p106
        %p159 = pneg %p103
        %s160 = sand.u32 %s93, 1
        %s161 = scalar_lea.sflag [#allocation3], %s160
        %s162 = sand.u32 %s93, 1
        %s163 = smul.addr %s162, 256
        %s164 = scalar_lea.vmem [#allocation2], %s163
        %s165 = smul.u32 32, %s17
        %p166 = scmp.lt.s32.totalorder %s165, 63
        %s167 = scalar_select %p166, %s165, 63
        %s168 = smul.addr %s167, 4
        %s169 = scalar_lea.vmem %s0, %s168
        %s170 = smul.u32 32, %s17
        %s171 = smul.u32 32, %s17
        %v173 = vld [vmem:[%s169] sm:$0xf]
        %v174 = vld [vmem:[%s169 + $0x4] sm:$0xf]
        %v175 = vld [vmem:[%s169 + $0x8] sm:$0xf]
        %v176 = vld [vmem:[%s169 + $0xc] sm:$0xf]
        %v177 = vld [vmem:[%s169 + $0x10] sm:$0xf]
        %v178 = vld [vmem:[%s169 + $0x14] sm:$0xf]
        %v179 = vld [vmem:[%s169 + $0x18] sm:$0xf]
        %v180 = vld [vmem:[%s169 + $0x1c] sm:$0xf]
        %v181 = vld [vmem:[%s169 + $0x20] sm:$0xf]
        %v182 = vld [vmem:[%s169 + $0x24] sm:$0xf]
        %v183 = vld [vmem:[%s169 + $0x28] sm:$0xf]
        %v184 = vld [vmem:[%s169 + $0x2c] sm:$0xf]
        %v185 = vld [vmem:[%s169 + $0x30] sm:$0xf]
        %v186 = vld [vmem:[%s169 + $0x34] sm:$0xf]
        %v187 = vld [vmem:[%s169 + $0x38] sm:$0xf]
        %v188 = vld [vmem:[%s169 + $0x3c] sm:$0xf]
        %v189 = vld [vmem:[%s169 + $0x40] sm:$0xf]
        %v190 = vld [vmem:[%s169 + $0x44] sm:$0xf]
        %v191 = vld [vmem:[%s169 + $0x48] sm:$0xf]
        %v192 = vld [vmem:[%s169 + $0x4c] sm:$0xf]
        %v193 = vld [vmem:[%s169 + $0x50] sm:$0xf]
        %v194 = vld [vmem:[%s169 + $0x54] sm:$0xf]
        %v195 = vld [vmem:[%s169 + $0x58] sm:$0xf]
        %v196 = vld [vmem:[%s169 + $0x5c] sm:$0xf]
        %v197 = vld [vmem:[%s169 + $0x60] sm:$0xf]
        %v198 = vld [vmem:[%s169 + $0x64] sm:$0xf]
        %v199 = vld [vmem:[%s169 + $0x68] sm:$0xf]
        %v200 = vld [vmem:[%s169 + $0x6c] sm:$0xf]
        %v201 = vld [vmem:[%s169 + $0x70] sm:$0xf]
        %v202 = vld [vmem:[%s169 + $0x74] sm:$0xf]
        %v203 = vld [vmem:[%s169 + $0x78] sm:$0xf]
        %v204 = vld [vmem:[%s169 + $0x7c] sm:$0xf]
        %v205 = vld [vmem:[%s1] sm:$0x3]
        %v206 = vld [vmem:[%s2] sm:$0x1]
        %v208 = vperm.slane %v206, 0
        %v242 = vunpack.c.l.b16 %v173
        %v243 = vunpack.c.l.b16 %v174
        %v244 = vunpack.c.l.b16 %v175
        %v245 = vunpack.c.l.b16 %v176
        %v246 = vunpack.c.l.b16 %v177
        %v247 = vunpack.c.l.b16 %v178
        %v248 = vunpack.c.l.b16 %v179
        %v249 = vunpack.c.l.b16 %v180
        %v250 = vunpack.c.l.b16 %v181
        %v251 = vunpack.c.l.b16 %v182
        %v252 = vunpack.c.l.b16 %v183
        %v253 = vunpack.c.l.b16 %v184
        %v254 = vunpack.c.l.b16 %v185
        %v255 = vunpack.c.l.b16 %v186
        %v256 = vunpack.c.l.b16 %v187
        %v257 = vunpack.c.l.b16 %v188
        %v258 = vunpack.c.l.b16 %v189
        %v259 = vunpack.c.l.b16 %v190
        %v260 = vunpack.c.l.b16 %v191
        %v261 = vunpack.c.l.b16 %v192
        %v262 = vunpack.c.l.b16 %v193
        %v263 = vunpack.c.l.b16 %v194
        %v264 = vunpack.c.l.b16 %v195
        %v265 = vunpack.c.l.b16 %v196
        %v266 = vunpack.c.l.b16 %v197
        %v267 = vunpack.c.l.b16 %v198
        %v268 = vunpack.c.l.b16 %v199
        %v269 = vunpack.c.l.b16 %v200
        %v270 = vunpack.c.l.b16 %v201
        %v271 = vunpack.c.l.b16 %v202
        %v272 = vunpack.c.l.b16 %v203
        %v273 = vunpack.c.l.b16 %v204
        %v274 = vpack.c.b16 %v243, %v242
        %v275 = vpack.c.b16 %v245, %v244
        %v276 = vpack.c.b16 %v247, %v246
        %v277 = vpack.c.b16 %v249, %v248
        %v278 = vpack.c.b16 %v251, %v250
        %v279 = vpack.c.b16 %v253, %v252
        %v280 = vpack.c.b16 %v255, %v254
        %v281 = vpack.c.b16 %v257, %v256
        %v282 = vpack.c.b16 %v259, %v258
        %v283 = vpack.c.b16 %v261, %v260
        %v284 = vpack.c.b16 %v263, %v262
        %v285 = vpack.c.b16 %v265, %v264
        %v286 = vpack.c.b16 %v267, %v266
        %v287 = vpack.c.b16 %v269, %v268
        %v288 = vpack.c.b16 %v271, %v270
        %v289 = vpack.c.b16 %v273, %v272
        %vm290 = vcmask 23552
        %v292 = vsel %vm290, %v274, 0
        %v295 = vsel %vm290, %v275, 0
        %v298 = vsel %vm290, %v276, 0
        %v301 = vsel %vm290, %v277, 0
        %v304 = vsel %vm290, %v278, 0
        %v307 = vsel %vm290, %v279, 0
        %v310 = vsel %vm290, %v280, 0
        %v313 = vsel %vm290, %v281, 0
        %v316 = vsel %vm290, %v282, 0
        %v319 = vsel %vm290, %v283, 0
        %v322 = vsel %vm290, %v284, 0
        %v325 = vsel %vm290, %v285, 0
        %v328 = vsel %vm290, %v286, 0
        %v331 = vsel %vm290, %v287, 0
        %v334 = vsel %vm290, %v288, 0
        %v337 = vsel %vm290, %v289, 0
        %vm339 = vcmask 1040384
        %vm340 = vcmask 1041408
        %v341 = vsel %vm339, 4294967295, 65535
        %v342 = vsel %vm340, %v341, 0
        %v344 = vand.u32 %v205, %v342
        %346 = vmatpush.bf16.msra.mxu0 0
        %347 = vmatpush.bf16.msra.mxu0 0
        %348 = vmatpush.bf16.msra.mxu0 0
        %349 = vmatpush.bf16.msra.mxu0 0
        %350 = vmatpush.bf16.msra.mxu0 0
        %351 = vmatpush.bf16.msra.mxu0 0
        %352 = vmatpush.bf16.msra.mxu0 0
        %353 = vmatpush.bf16.msra.mxu0 %v344
        %354 = vmatmul.bf16.gmra.mxu0 %v292
        %v355 = vpop.f32.mrf.mxu0
        %v356 = vadd.f32 %v208, %v355
        %v357 = vpop.f32.mrf.mxu0
        %v358 = vadd.f32 %v208, %v357
        %359 = vmatmul.bf16.gmra.mxu0 %v295
        %v360 = vpop.f32.mrf.mxu0
        %v361 = vadd.f32 %v208, %v360
        %v362 = vpop.f32.mrf.mxu0
        %v363 = vadd.f32 %v208, %v362
        %364 = vmatmul.bf16.gmra.mxu0 %v298
        %v365 = vpop.f32.mrf.mxu0
        %v366 = vadd.f32 %v208, %v365
        %v367 = vpop.f32.mrf.mxu0
        %v368 = vadd.f32 %v208, %v367
        %369 = vmatmul.bf16.gmra.mxu0 %v301
        %v370 = vpop.f32.mrf.mxu0
        %v371 = vadd.f32 %v208, %v370
        %v372 = vpop.f32.mrf.mxu0
        %v373 = vadd.f32 %v208, %v372
        %374 = vmatmul.bf16.gmra.mxu0 %v304
        %v375 = vpop.f32.mrf.mxu0
        %v376 = vadd.f32 %v208, %v375
        %v377 = vpop.f32.mrf.mxu0
        %v378 = vadd.f32 %v208, %v377
        %379 = vmatmul.bf16.gmra.mxu0 %v307
        %v380 = vpop.f32.mrf.mxu0
        %v381 = vadd.f32 %v208, %v380
        %v382 = vpop.f32.mrf.mxu0
        %v383 = vadd.f32 %v208, %v382
        %384 = vmatmul.bf16.gmra.mxu0 %v310
        %v385 = vpop.f32.mrf.mxu0
        %v386 = vadd.f32 %v208, %v385
        %v387 = vpop.f32.mrf.mxu0
        %v388 = vadd.f32 %v208, %v387
        %389 = vmatmul.bf16.gmra.mxu0 %v313
        %v390 = vpop.f32.mrf.mxu0
        %v391 = vadd.f32 %v208, %v390
        %v392 = vpop.f32.mrf.mxu0
        %v393 = vadd.f32 %v208, %v392
        %394 = vmatmul.bf16.gmra.mxu0 %v316
        %v395 = vpop.f32.mrf.mxu0
        %v396 = vadd.f32 %v208, %v395
        %v397 = vpop.f32.mrf.mxu0
        %v398 = vadd.f32 %v208, %v397
        %399 = vmatmul.bf16.gmra.mxu0 %v319
        %v400 = vpop.f32.mrf.mxu0
        %v401 = vadd.f32 %v208, %v400
        %v402 = vpop.f32.mrf.mxu0
        %v403 = vadd.f32 %v208, %v402
        %404 = vmatmul.bf16.gmra.mxu0 %v322
        %v405 = vpop.f32.mrf.mxu0
        %v406 = vadd.f32 %v208, %v405
        %v407 = vpop.f32.mrf.mxu0
        %v408 = vadd.f32 %v208, %v407
        %409 = vmatmul.bf16.gmra.mxu0 %v325
        %v410 = vpop.f32.mrf.mxu0
        %v411 = vadd.f32 %v208, %v410
        %v412 = vpop.f32.mrf.mxu0
        %v413 = vadd.f32 %v208, %v412
        %414 = vmatmul.bf16.gmra.mxu0 %v328
        %v415 = vpop.f32.mrf.mxu0
        %v416 = vadd.f32 %v208, %v415
        %v417 = vpop.f32.mrf.mxu0
        %v418 = vadd.f32 %v208, %v417
        %419 = vmatmul.bf16.gmra.mxu0 %v331
        %v420 = vpop.f32.mrf.mxu0
        %v421 = vadd.f32 %v208, %v420
        %v422 = vpop.f32.mrf.mxu0
        %v423 = vadd.f32 %v208, %v422
        %424 = vmatmul.bf16.gmra.mxu0 %v334
        %v425 = vpop.f32.mrf.mxu0
        %v426 = vadd.f32 %v208, %v425
        %v427 = vpop.f32.mrf.mxu0
        %v428 = vadd.f32 %v208, %v427
        %429 = vmatmul.bf16.gmra.mxu0 %v337
        %v430 = vpop.f32.mrf.mxu0
        %v431 = vadd.f32 %v208, %v430
        %v432 = vpop.f32.mrf.mxu0
        %v433 = vadd.f32 %v208, %v432
        %434 = vdwg.mxu0
        %vm435 = vcmp.gt.f32.partialorder %v356, 0.0
        %vm436 = vcmp.gt.f32.partialorder %v358, 0.0
        %vm437 = vcmp.gt.f32.partialorder %v361, 0.0
        %vm438 = vcmp.gt.f32.partialorder %v363, 0.0
        %vm439 = vcmp.gt.f32.partialorder %v366, 0.0
        %vm440 = vcmp.gt.f32.partialorder %v368, 0.0
        %vm441 = vcmp.gt.f32.partialorder %v371, 0.0
        %vm442 = vcmp.gt.f32.partialorder %v373, 0.0
        %vm443 = vcmp.gt.f32.partialorder %v376, 0.0
        %vm444 = vcmp.gt.f32.partialorder %v378, 0.0
        %vm445 = vcmp.gt.f32.partialorder %v381, 0.0
        %vm446 = vcmp.gt.f32.partialorder %v383, 0.0
        %vm447 = vcmp.gt.f32.partialorder %v386, 0.0
        %vm448 = vcmp.gt.f32.partialorder %v388, 0.0
        %vm449 = vcmp.gt.f32.partialorder %v391, 0.0
        %vm450 = vcmp.gt.f32.partialorder %v393, 0.0
        %vm451 = vcmp.gt.f32.partialorder %v396, 0.0
        %vm452 = vcmp.gt.f32.partialorder %v398, 0.0
        %vm453 = vcmp.gt.f32.partialorder %v401, 0.0
        %vm454 = vcmp.gt.f32.partialorder %v403, 0.0
        %vm455 = vcmp.gt.f32.partialorder %v406, 0.0
        %vm456 = vcmp.gt.f32.partialorder %v408, 0.0
        %vm457 = vcmp.gt.f32.partialorder %v411, 0.0
        %vm458 = vcmp.gt.f32.partialorder %v413, 0.0
        %vm459 = vcmp.gt.f32.partialorder %v416, 0.0
        %vm460 = vcmp.gt.f32.partialorder %v418, 0.0
        %vm461 = vcmp.gt.f32.partialorder %v421, 0.0
        %vm462 = vcmp.gt.f32.partialorder %v423, 0.0
        %vm463 = vcmp.gt.f32.partialorder %v426, 0.0
        %vm464 = vcmp.gt.f32.partialorder %v428, 0.0
        %vm465 = vcmp.gt.f32.partialorder %v431, 0.0
        %vm466 = vcmp.gt.f32.partialorder %v433, 0.0
        %v467 = vmul.f32 %v356, 0.2
        %v468 = vmul.f32 %v358, 0.2
        %v469 = vmul.f32 %v361, 0.2
        %v470 = vmul.f32 %v363, 0.2
        %v471 = vmul.f32 %v366, 0.2
        %v472 = vmul.f32 %v368, 0.2
        %v473 = vmul.f32 %v371, 0.2
        %v474 = vmul.f32 %v373, 0.2
        %v475 = vmul.f32 %v376, 0.2
        %v476 = vmul.f32 %v378, 0.2
        %v477 = vmul.f32 %v381, 0.2
        %v478 = vmul.f32 %v383, 0.2
        %v479 = vmul.f32 %v386, 0.2
        %v480 = vmul.f32 %v388, 0.2
        %v481 = vmul.f32 %v391, 0.2
        %v482 = vmul.f32 %v393, 0.2
        %v483 = vmul.f32 %v396, 0.2
        %v484 = vmul.f32 %v398, 0.2
        %v485 = vmul.f32 %v401, 0.2
        %v486 = vmul.f32 %v403, 0.2
        %v487 = vmul.f32 %v406, 0.2
        %v488 = vmul.f32 %v408, 0.2
        %v489 = vmul.f32 %v411, 0.2
        %v490 = vmul.f32 %v413, 0.2
        %v491 = vmul.f32 %v416, 0.2
        %v492 = vmul.f32 %v418, 0.2
        %v493 = vmul.f32 %v421, 0.2
        %v494 = vmul.f32 %v423, 0.2
        %v495 = vmul.f32 %v426, 0.2
        %v496 = vmul.f32 %v428, 0.2
        %v497 = vmul.f32 %v431, 0.2
        %v498 = vmul.f32 %v433, 0.2
        %v499 = vsel %vm435, %v356, %v467
        %v500 = vsel %vm436, %v358, %v468
        %v501 = vsel %vm437, %v361, %v469
        %v502 = vsel %vm438, %v363, %v470
        %v503 = vsel %vm439, %v366, %v471
        %v504 = vsel %vm440, %v368, %v472
        %v505 = vsel %vm441, %v371, %v473
        %v506 = vsel %vm442, %v373, %v474
        %v507 = vsel %vm443, %v376, %v475
        %v508 = vsel %vm444, %v378, %v476
        %v509 = vsel %vm445, %v381, %v477
        %v510 = vsel %vm446, %v383, %v478
        %v511 = vsel %vm447, %v386, %v479
        %v512 = vsel %vm448, %v388, %v480
        %v513 = vsel %vm449, %v391, %v481
        %v514 = vsel %vm450, %v393, %v482
        %v515 = vsel %vm451, %v396, %v483
        %v516 = vsel %vm452, %v398, %v484
        %v517 = vsel %vm453, %v401, %v485
        %v518 = vsel %vm454, %v403, %v486
        %v519 = vsel %vm455, %v406, %v487
        %v520 = vsel %vm456, %v408, %v488
        %v521 = vsel %vm457, %v411, %v489
        %v522 = vsel %vm458, %v413, %v490
        %v523 = vsel %vm459, %v416, %v491
        %v524 = vsel %vm460, %v418, %v492
        %v525 = vsel %vm461, %v421, %v493
        %v526 = vsel %vm462, %v423, %v494
        %v527 = vsel %vm463, %v426, %v495
        %v528 = vsel %vm464, %v428, %v496
        %v529 = vsel %vm465, %v431, %v497
        %v530 = vsel %vm466, %v433, %v498
        %531 = vst [vmem:[%s164] sm:$0xff] %v499
        %532 = vst [vmem:[%s164 + $0x8] sm:$0xff] %v500
        %533 = vst [vmem:[%s164 + $0x10] sm:$0xff] %v501
        %534 = vst [vmem:[%s164 + $0x18] sm:$0xff] %v502
        %535 = vst [vmem:[%s164 + $0x20] sm:$0xff] %v503
        %536 = vst [vmem:[%s164 + $0x28] sm:$0xff] %v504
        %537 = vst [vmem:[%s164 + $0x30] sm:$0xff] %v505
        %538 = vst [vmem:[%s164 + $0x38] sm:$0xff] %v506
        %539 = vst [vmem:[%s164 + $0x40] sm:$0xff] %v507
        %540 = vst [vmem:[%s164 + $0x48] sm:$0xff] %v508
        %541 = vst [vmem:[%s164 + $0x50] sm:$0xff] %v509
        %542 = vst [vmem:[%s164 + $0x58] sm:$0xff] %v510
        %543 = vst [vmem:[%s164 + $0x60] sm:$0xff] %v511
        %544 = vst [vmem:[%s164 + $0x68] sm:$0xff] %v512
        %545 = vst [vmem:[%s164 + $0x70] sm:$0xff] %v513
        %546 = vst [vmem:[%s164 + $0x78] sm:$0xff] %v514
        %547 = vst [vmem:[%s164 + $0x80] sm:$0xff] %v515
        %548 = vst [vmem:[%s164 + $0x88] sm:$0xff] %v516
        %549 = vst [vmem:[%s164 + $0x90] sm:$0xff] %v517
        %550 = vst [vmem:[%s164 + $0x98] sm:$0xff] %v518
        %551 = vst [vmem:[%s164 + $0xa0] sm:$0xff] %v519
        %552 = vst [vmem:[%s164 + $0xa8] sm:$0xff] %v520
        %553 = vst [vmem:[%s164 + $0xb0] sm:$0xff] %v521
        %554 = vst [vmem:[%s164 + $0xb8] sm:$0xff] %v522
        %555 = vst [vmem:[%s164 + $0xc0] sm:$0xff] %v523
        %556 = vst [vmem:[%s164 + $0xc8] sm:$0xff] %v524
        %557 = vst [vmem:[%s164 + $0xd0] sm:$0xff] %v525
        %558 = vst [vmem:[%s164 + $0xd8] sm:$0xff] %v526
        %559 = vst [vmem:[%s164 + $0xe0] sm:$0xff] %v527
        %560 = vst [vmem:[%s164 + $0xe8] sm:$0xff] %v528
        %561 = vst [vmem:[%s164 + $0xf0] sm:$0xff] %v529
        %562 = vst [vmem:[%s164 + $0xf8] sm:$0xff] %v530
        %s563 = sand.u32 %s93, 1
        %s564 = scalar_lea.sflag [#allocation3], %s563
        %s565 = sand.u32 %s93, 1
        %s566 = smul.addr %s565, 256
        %s567 = scalar_lea.vmem [#allocation2], %s566
        // Predicated region
        $region33: #{tpu_custom_call.1} parent=31 // pred_check
          %p568 = pneg %p103
        $region34: #{tpu_custom_call.1} parent=31 // pred_check_branch
          %570 = sbr.rel (%p568) target = $region36
        $region35: #{tpu_custom_call.1} parent=31 // pred_region
          %s571 = smul.u32 32, %s17
          %573 = vsyncadd %s564, 0
          %s574 = smul.addr %s571, 8
          %s575 = scalar_lea.hbm %s3, %s574
          %s576 = sshll.u32 %s567, 4
          %s577 = int_to_ptr.vmem [resolvable:$true] %s576
          %s578 = sshll.u32 %s575, 4
          %s579 = int_to_ptr.hbm [resolvable:$true] %s578
          %584 = dma.vmem_to_hbm [thread:$0]  %s577, 4096, %s579, %s564, 128, 128, 8
        $region36: #{tpu_custom_call.1} parent=31 // pred_fallthru
          _
      $region32: #{tpu_custom_call.1} parent=5 // pred_fallthru
        _
      %p585 = scmp.le.s32.totalorder 2, %s12
      // Predicated region
      $region37: #{tpu_custom_call.1} parent=5 // pred_check
        %p586 = pneg %p585
      $region38: #{tpu_custom_call.1} parent=5 // pred_check_branch
        %588 = sbr.rel (%p586) target = $region40
      $region39: #{tpu_custom_call.1} parent=5 // pred_region
        %s589 = ssub.s32 %s12, 2
        // Predicated region
        $region41: #{tpu_custom_call.1} parent=39 // pred_check
          %p590 = pneg %p109
        $region42: #{tpu_custom_call.1} parent=39 // pred_check_branch
          %592 = sbr.rel (%p590) target = $region44
        $region43: #{tpu_custom_call.1} parent=39 // pred_region
          %s593 = sand.u32 %s94, 1
          %s594 = scalar_lea.sflag [#allocation3], %s593
          %s595 = sand.u32 %s94, 1
          %s596 = smul.addr %s595, 256
          %s597 = scalar_lea.vmem [#allocation2], %s596
          %599 = dma.done %s594, 4096
        $region44: #{tpu_custom_call.1} parent=39 // pred_fallthru
          _
      $region40: #{tpu_custom_call.1} parent=5 // pred_fallthru
        _
    $region6: #{tpu_custom_call.1} parent=1 // loop_footer
      %s16 = sadd.s32 1, %s12
    $region7: #{tpu_custom_call.1} parent=1 // loop_footer_branch
      %11 = sbr.rel target = $region3
    $region8: #{tpu_custom_call.1} parent=1 // loop_exit
      _
    %600 = vsyncpa [#allocation3], 1
    %s601 = scalar_lea.sflag [#allocation3], 1
    %602 = vsyncpa %s601, 1

</llo_original>
